<compile_context>
chip_gen: v6e
topology: v6e:2x2x1
jax: 0.10.0
libtpu: 0.0.40
codegen_flags: <defaults>
</compile_context>

<pallas_src>
import functools

import jax
import jax.numpy as jnp
from jax.experimental import pallas as pl
from jax.experimental.pallas import tpu as pltpu


def _round_up(x, m):
    return ((x + m - 1) // m) * m


def _vmem_capacity_bytes():
    try:
        return int(pltpu.get_tpu_info().vmem_capacity_bytes)
    except Exception:
        return 64 * 1024 * 1024  # conservative: v7x per-TensorCore VMEM


def _divisor_tiles(dim_p, unit, cap=None):
    """Ascending multiples of `unit` <= min(cap, dim_p) that divide dim_p."""
    cap = dim_p if cap is None else min(cap, dim_p)
    tiles = [t for t in range(unit, cap + 1, unit) if dim_p % t == 0]
    return tiles or [unit]


def _largest_divisor_tile(dim_p, unit, cap=None):
    return _divisor_tiles(dim_p, unit, cap)[-1]


# ---------------------------------------------------------------------------
# Kernels
# ---------------------------------------------------------------------------
def _key_matmul_kernel(x_ref, w_ref, o_ref):
    # x_ref: (tm, Kp), w_ref: (Kp, tn)  (weight already transposed to K-major)
    o_ref[...] = jnp.dot(
        x_ref[...], w_ref[...], preferred_element_type=jnp.float32
    ).astype(o_ref.dtype)


def _key_matmul_acc_kernel(x_ref, w_ref, o_ref, acc_ref):
    # Fallback for very large K: tiled-K reduction with an f32 accumulator.
    @pl.when(pl.program_id(2) == 0)
    def _():
        acc_ref[...] = jnp.zeros_like(acc_ref)

    acc_ref[...] += jnp.dot(
        x_ref[...], w_ref[...], preferred_element_type=jnp.float32
    )

    @pl.when(pl.program_id(2) == pl.num_programs(2) - 1)
    def _():
        o_ref[...] = acc_ref[...].astype(o_ref.dtype)


# ---------------------------------------------------------------------------
# Wrapper
# ---------------------------------------------------------------------------
@functools.partial(jax.jit, static_argnames=("compute_dtype", "max_vmem_bytes"))
def key_forward(x, weight, compute_dtype=None, max_vmem_bytes=None):
    """x: (..., dim_input); weight: (dim_attn, dim_input) [PyTorch layout].

    compute_dtype: optional MXU input dtype (e.g. jnp.bfloat16 on v6e/v7x);
    accumulation is always f32 and the output keeps x's original dtype.
    max_vmem_bytes: optional override of the VMEM tiling budget (testing).
    """
    *lead, D_in = x.shape
    D_attn, D_in_w = weight.shape
    assert D_in == D_in_w
    out_dtype = x.dtype

    if compute_dtype is not None:
        x = x.astype(compute_dtype)
        weight = weight.astype(compute_dtype)

    bi = jnp.dtype(x.dtype).itemsize          # matmul-input bytes
    bo = jnp.dtype(out_dtype).itemsize        # output bytes
    sub = max(8, 8 * (4 // bi))               # sublane multiple: f32 8, bf16 16

    M = 1
    for d in lead:
        M *= d
    K, N = D_in, D_attn

    x2d = x.reshape(M, K)
    wt = weight.T                              # one-time relayout to (K, N)

    # Pad only to the hardware minimum (not to tile multiples).
    Mp, Kp, Np = _round_up(M, sub), _round_up(K, 128), _round_up(N, 128)
    if (Mp, Kp) != (M, K):
        x2d = jnp.pad(x2d, ((0, Mp - M), (0, Kp - K)))
    if (Kp, Np) != (K, N):
        wt = jnp.pad(wt, ((0, Kp - K), (0, Np - N)))

    vmem_cap = _vmem_capacity_bytes()
    budget = int(vmem_cap * 0.70) if max_vmem_bytes is None else int(max_vmem_bytes)

    def fp_fullk(tm, tn):  # double-buffered footprint with full-K blocks
        return 2 * tm * Kp * bi + 2 * Kp * tn * bi + 2 * tm * tn * bo

    use_fullk = fp_fullk(sub, 128) <= budget

    if use_fullk:
        # --- 2D grid, full K per block (no accumulator, no K-step overhead) ---
        # Prefer a fully VMEM-resident weight (tn == Np); otherwise the largest
        # 128-multiple divisor of Np keeping the weight tile under ~half budget.
        tn_cap = max(128, ((budget // 2) // (2 * Kp * bi)) // 128 * 128)
        tn = _largest_divisor_tile(Np, 128, tn_cap)
        rem = max(0, budget - 2 * Kp * tn * bi)
        per_row = 2 * Kp * bi + 2 * tn * bo
        tm_cap = max(sub, min(1024, (rem // per_row) // sub * sub))
        tm = _largest_divisor_tile(Mp, sub, tm_cap)
        # Megacore balance: avoid a single giant block for big problems.
        if Mp // tm == 1 and Np // tn == 1 and Mp >= 512:
            tm = _largest_divisor_tile(Mp, sub, Mp // 2)

        n_i, n_j = Mp // tm, Np // tn
        grid = (n_i, n_j)
        kernel = _key_matmul_kernel
        in_specs = [
            pl.BlockSpec((tm, Kp), lambda i, j: (i, 0)),   # x tile (full K)
            pl.BlockSpec((Kp, tn), lambda i, j: (0, j)),   # W^T tile (full K)
        ]
        out_specs = pl.BlockSpec((tm, tn), lambda i, j: (i, j))
        scratch_shapes = []
        dim_sem = ("parallel", "parallel")
        footprint = fp_fullk(tm, tn)
        w_reads = 1 if n_j == 1 else n_i        # resident weight read once
        bytes_accessed = Mp * Kp * bi + Kp * Np * bi * w_reads + Mp * Np * bo
    else:
        # --- rare fallback: K too large for VMEM -> tiled-K reduction ---
        def fp_3d(tm, tn, tk):
            return 2 * (tm * tk + tk * tn) * bi + 2 * tm * tn * bo + tm * tn * 4

        tms = _divisor_tiles(Mp, sub, 512)
        tns = _divisor_tiles(Np, 128, 512)
        tks = _divisor_tiles(Kp, 128, 2048)
        tm, tn, tk = tms[-1], tns[-1], tks[-1]
        while fp_3d(tm, tn, tk) > budget:
            if tk > tks[0]:
                tk = tks[tks.index(tk) - 1]
            elif tm > tms[0]:
                tm = tms[tms.index(tm) - 1]
            elif tn > tns[0]:
                tn = tns[tns.index(tn) - 1]
            else:
                break

        n_i, n_j, n_k = Mp // tm, Np // tn, Kp // tk
        grid = (n_i, n_j, n_k)
        kernel = _key_matmul_acc_kernel
        in_specs = [
            pl.BlockSpec((tm, tk), lambda i, j, k: (i, k)),
            pl.BlockSpec((tk, tn), lambda i, j, k: (k, j)),
        ]
        out_specs = pl.BlockSpec((tm, tn), lambda i, j, k: (i, j))
        scratch_shapes = [pltpu.VMEM((tm, tn), jnp.float32)]
        dim_sem = ("parallel", "parallel", "arbitrary")
        footprint = fp_3d(tm, tn, tk)
        bytes_accessed = Mp * Kp * bi * n_j + Kp * Np * bi * n_i + Mp * Np * bo

    vmem_limit = min(
        int(vmem_cap * 0.92),
        max(32 * 1024 * 1024, int(footprint) + (8 << 20)),
    )

    cost = pl.CostEstimate(
        flops=2 * Mp * Np * Kp,
        transcendentals=0,
        bytes_accessed=int(bytes_accessed),
    )

    out2d = pl.pallas_call(
        kernel,
        out_shape=jax.ShapeDtypeStruct((Mp, Np), out_dtype),
        grid_spec=pltpu.PrefetchScalarGridSpec(
            num_scalar_prefetch=0,
            grid=grid,
            in_specs=in_specs,
            out_specs=out_specs,
            scratch_shapes=scratch_shapes,
        ),
        compiler_params=pltpu.CompilerParams(
            dimension_semantics=dim_sem,
            vmem_limit_bytes=vmem_limit,
        ),
        cost_estimate=cost,
    )(x2d, wt)

    out = out2d
    if (Mp, Np) != (M, N):
        out = out[:M, :N]
    return out.reshape(*lead, N)


if __name__ == "__main__":
    # --- small demo shapes consistent with an attention "Key" projection ---
    B, S = 2, 8
    dim_input, dim_attn = 32, 32

    key = jax.random.PRNGKey(0)
    kx, kw, kx2, kw2 = jax.random.split(key, 4)

    x = jax.random.normal(kx, (B, S, dim_input), dtype=jnp.float32)
    # Deterministic weight mimicking nn.Linear's uniform(-1/sqrt(fan_in), ...)
    bound = 1.0 / (dim_input ** 0.5)
    weight = jax.random.uniform(
        kw, (dim_attn, dim_input), dtype=jnp.float32, minval=-bound, maxval=bound
    )

    out = jax.block_until_ready(key_forward(x, weight))
    ref = x @ weight.T
    assert out.shape == (B, S, dim_attn)
    assert jnp.allclose(out, ref, atol=1e-5, rtol=1e-5)

    # --- shapes exercising K/N padding-to-128 and multi-block M ---
    B2, S2, din2, dattn2 = 2, 256, 640, 384
    x2 = jax.random.normal(kx2, (B2, S2, din2), dtype=jnp.float32)
    bound2 = 1.0 / (din2 ** 0.5)
    w2 = jax.random.uniform(
        kw2, (dattn2, din2), dtype=jnp.float32, minval=-bound2, maxval=bound2
    )

    out2 = jax.block_until_ready(key_forward(x2, w2))
    ref2 = x2 @ w2.T
    assert out2.shape == (B2, S2, dattn2)
    assert jnp.allclose(out2, ref2, atol=1e-4, rtol=1e-4)

    # bf16-in / f32-accumulate path (recommended on v6e/v7x), loose tolerance.
    out2_bf16 = jax.block_until_ready(
        key_forward(x2, w2, compute_dtype=jnp.bfloat16)
    )
    assert jnp.allclose(out2_bf16, ref2, atol=5e-2, rtol=5e-2)

    # Force the tiled-K accumulator fallback with a tiny VMEM budget so that
    # the rare large-K path is also verified for correctness.
    out2_acc = jax.block_until_ready(
        key_forward(x2, w2, max_vmem_bytes=512 * 1024)
    )
    assert jnp.allclose(out2_acc, ref2, atol=1e-4, rtol=1e-4)

    print("KERNEL_OK")
</pallas_src>

<mosaic_0001>
module attributes {stable_mosaic.version = 11 : i64} {
  func.func @_key_matmul_kernel(%arg0: i32, %arg1: i32, %arg2: memref<16x128xf32, #tpu.memory_space<vmem>>, %arg3: memref<128x128xf32, #tpu.memory_space<vmem>>, %arg4: memref<16x128xf32, #tpu.memory_space<vmem>>) attributes {dimension_semantics = [#tpu.dimension_semantics<parallel>, #tpu.dimension_semantics<parallel>], iteration_bounds = array<i64: 1, 1>, scalar_prefetch = 0 : i64, scratch_operands = 0 : i64, tpu.core_type = #tpu.core_type<tc>, window_params = [{transform_indices = @transform_0, window_bounds = array<i64: 16, 128>}, {transform_indices = @transform_1, window_bounds = array<i64: 128, 128>}, {transform_indices = @transform_2, window_bounds = array<i64: 16, 128>}]} {
    %c0 = arith.constant 0 : index
    %c0_0 = arith.constant 0 : index
    %0 = vector.load %arg2[%c0, %c0_0] : memref<16x128xf32, #tpu.memory_space<vmem>>, vector<16x128xf32>
    %c0_1 = arith.constant 0 : index
    %c0_2 = arith.constant 0 : index
    %1 = vector.load %arg3[%c0_1, %c0_2] : memref<128x128xf32, #tpu.memory_space<vmem>>, vector<128x128xf32>
    %cst = arith.constant dense<0.000000e+00> : vector<16x128xf32>
    %2 = tpu.matmul %0, %1, %cst {dimension_numbers = #tpu.dot_dimension_numbers<[1], [0], [0], [1], [0, 0, 1, 1], [], []>} : vector<16x128xf32>, vector<128x128xf32>, vector<16x128xf32> -> vector<16x128xf32>
    %c0_3 = arith.constant 0 : index
    %c0_4 = arith.constant 0 : index
    %3 = vector.load %arg4[%c0_3, %c0_4] : memref<16x128xf32, #tpu.memory_space<vmem>>, vector<16x128xf32>
    tpu.vector_store %arg4[%c0_3, %c0_4], %2 {strides = array<i32>} : memref<16x128xf32, #tpu.memory_space<vmem>>, vector<16x128xf32>,
    return
  }
  func.func @transform_0(%arg0: i32, %arg1: i32) -> (i32, i32) {
    %c0_i32 = arith.constant 0 : i32
    %c0_i32_0 = arith.constant 0 : i32
    return %arg0, %c0_i32 : i32, i32
  }
  func.func @transform_1(%arg0: i32, %arg1: i32) -> (i32, i32) {
    %c0_i32 = arith.constant 0 : i32
    %c0_i32_0 = arith.constant 0 : i32
    return %c0_i32, %arg1 : i32, i32
  }
  func.func @transform_2(%arg0: i32, %arg1: i32) -> (i32, i32) {
    %c0_i32 = arith.constant 0 : i32
    return %arg0, %arg1 : i32, i32
  }
}

</mosaic_0001>

<llo_original>
// kernel: key_forward.1
$region0: #{key_forward.1}
  #allocation0 [shape = 'u32[]', space=smem, size = 0x4, offset = 0x4, fixed_abs, tag = 'smem constant byte address 0x4 - core index']
  #allocation1 [shape = 'u32[144,128]{1,0:T(1,128)}', space=vmem, size = 0x12000, scoped, tag = 'internal scratch']
  %s0 = inlined_call_operand.vmem [shape: f32[16,128], index: 0, kind: input, shape index: {}]
  %s1 = inlined_call_operand.vmem [shape: f32[128,128], index: 1, kind: input, shape index: {}]
  %s2 = inlined_call_operand.vmem [shape: f32[16,128], index: 2, kind: output, shape index: {}]
  %s3 = sld [smem:[#allocation0]]
  $region18: #{key_forward.1} parent=0
    _
  %s5 = ssub.s32 1, %s3
  %s6 = scalar_select 0, %s5, %s3
  // Predicated region
  $region2: #{key_forward.1} parent=0 // pred_check
    _
  $region3: #{key_forward.1} parent=0 // pred_check_branch
    %8 = sbr.rel (0) target = $region5
  $region4: #{key_forward.1} parent=0 // pred_region
    _
  $region5: #{key_forward.1} parent=0 // pred_fallthru
    _
  // Predicated region
  $region6: #{key_forward.1} parent=0 // pred_check
    _
  $region7: #{key_forward.1} parent=0 // pred_check_branch
    %10 = sbr.rel (0) target = $region9
  $region8: #{key_forward.1} parent=0 // pred_region
    _
  $region9: #{key_forward.1} parent=0 // pred_fallthru
    _
  %v11 = vld [vmem:[%s0] sm:$0xff]
  %v12 = vld [vmem:[%s0 + $0x8] sm:$0xff]
  %v13 = vld [vmem:[%s1] sm:$0xff]
  %v14 = vld [vmem:[%s1 + $0x8] sm:$0xff]
  %v15 = vld [vmem:[%s1 + $0x10] sm:$0xff]
  %v16 = vld [vmem:[%s1 + $0x18] sm:$0xff]
  %v17 = vld [vmem:[%s1 + $0x20] sm:$0xff]
  %v18 = vld [vmem:[%s1 + $0x28] sm:$0xff]
  %v19 = vld [vmem:[%s1 + $0x30] sm:$0xff]
  %v20 = vld [vmem:[%s1 + $0x38] sm:$0xff]
  %v21 = vld [vmem:[%s1 + $0x40] sm:$0xff]
  %v22 = vld [vmem:[%s1 + $0x48] sm:$0xff]
  %v23 = vld [vmem:[%s1 + $0x50] sm:$0xff]
  %v24 = vld [vmem:[%s1 + $0x58] sm:$0xff]
  %v25 = vld [vmem:[%s1 + $0x60] sm:$0xff]
  %v26 = vld [vmem:[%s1 + $0x68] sm:$0xff]
  %v27 = vld [vmem:[%s1 + $0x70] sm:$0xff]
  %v28 = vld [vmem:[%s1 + $0x78] sm:$0xff]
  %29 = vmatprep.subr.mxu0 0.0
  %30 = vmatpush1.msra.mxu0 %v28
  %31 = vmatprep.subr.mxu0 0.0
  %32 = vmatpush1.msra.mxu0 %v27
  %33 = vmatprep.subr.mxu0 0.0
  %34 = vmatpush1.msra.mxu0 %v26
  %35 = vmatprep.subr.mxu0 0.0
  %36 = vmatpush1.msra.mxu0 %v25
  %37 = vmatprep.subr.mxu0 0.0
  %38 = vmatpush1.msra.mxu0 %v24
  %39 = vmatprep.subr.mxu0 0.0
  %40 = vmatpush1.msra.mxu0 %v23
  %41 = vmatprep.subr.mxu0 0.0
  %42 = vmatpush1.msra.mxu0 %v22
  %43 = vmatprep.subr.mxu0 0.0
  %44 = vmatpush1.msra.mxu0 %v21
  %45 = vmatprep.subr.mxu0 0.0
  %46 = vmatpush1.msra.mxu0 %v20
  %47 = vmatprep.subr.mxu0 0.0
  %48 = vmatpush1.msra.mxu0 %v19
  %49 = vmatprep.subr.mxu0 0.0
  %50 = vmatpush1.msra.mxu0 %v18
  %51 = vmatprep.subr.mxu0 0.0
  %52 = vmatpush1.msra.mxu0 %v17
  %53 = vmatprep.subr.mxu0 0.0
  %54 = vmatpush1.msra.mxu0 %v16
  %55 = vmatprep.subr.mxu0 0.0
  %56 = vmatpush1.msra.mxu0 %v15
  %57 = vmatprep.subr.mxu0 0.0
  %58 = vmatpush1.msra.mxu0 %v14
  %59 = vmatprep.subr.mxu0 0.0
  %60 = vmatpush1.msra.mxu0 %v13
  %61 = vmatprep.subr.mxu0 0.0
  %62 = vmatpush2.msra.mxu0 0.0
  %63 = vmatprep.subr.mxu0 0.0
  %64 = vmatpush2.msra.mxu0 0.0
  %65 = vmatprep.subr.mxu0 0.0
  %66 = vmatpush2.msra.mxu0 0.0
  %67 = vmatprep.subr.mxu0 0.0
  %68 = vmatpush2.msra.mxu0 0.0
  %69 = vmatprep.subr.mxu0 0.0
  %70 = vmatpush2.msra.mxu0 0.0
  %71 = vmatprep.subr.mxu0 0.0
  %72 = vmatpush2.msra.mxu0 0.0
  %73 = vmatprep.subr.mxu0 0.0
  %74 = vmatpush2.msra.mxu0 0.0
  %75 = vmatprep.subr.mxu0 0.0
  %76 = vmatpush2.msra.mxu0 0.0
  %77 = vmatprep.subr.mxu0 0.0
  %78 = vmatpush2.msra.mxu0 0.0
  %79 = vmatprep.subr.mxu0 0.0
  %80 = vmatpush2.msra.mxu0 0.0
  %81 = vmatprep.subr.mxu0 0.0
  %82 = vmatpush2.msra.mxu0 0.0
  %83 = vmatprep.subr.mxu0 0.0
  %84 = vmatpush2.msra.mxu0 0.0
  %85 = vmatprep.subr.mxu0 0.0
  %86 = vmatpush2.msra.mxu0 0.0
  %87 = vmatprep.subr.mxu0 0.0
  %88 = vmatpush2.msra.mxu0 0.0
  %89 = vmatprep.subr.mxu0 0.0
  %90 = vmatpush2.msra.mxu0 0.0
  %91 = vmatprep.subr.mxu0 0.0
  %92 = vmatpush2.msra.mxu0 0.0
  %93 = vmatprep.mubr.f32.mxu0 0.0
  %94 = vmatmul.mubr.f32.gmra.mxu0 %v11
  %v95 = vpop.f32.mrf.mxu0
  %v96 = vadd.f32 0.0, %v95
  %v97 = vpop.f32.mrf.mxu0
  %98 = vmatprep.mubr.f32.mxu0 0.0
  %99 = vmatmul.mubr.f32.gmra.mxu0 %v12
  %v100 = vpop.f32.mrf.mxu0
  %v101 = vadd.f32 0.0, %v100
  %v102 = vpop.f32.mrf.mxu0
  %103 = vdwg.mxu0
  %104 = vst [vmem:[%s2] sm:$0xff] %v96
  %105 = vst [vmem:[%s2 + $0x8] sm:$0xff] %v101
  // Predicated region
  $region10: #{key_forward.1} parent=0 // pred_check
    _
  $region11: #{key_forward.1} parent=0 // pred_check_branch
    %107 = sbr.rel (0) target = $region13
  $region12: #{key_forward.1} parent=0 // pred_region
    _
  $region13: #{key_forward.1} parent=0 // pred_fallthru
    _
  // Predicated region
  $region14: #{key_forward.1} parent=0 // pred_check
    _
  $region15: #{key_forward.1} parent=0 // pred_check_branch
    %109 = sbr.rel (0) target = $region17
  $region16: #{key_forward.1} parent=0 // pred_region
    _
  $region17: #{key_forward.1} parent=0 // pred_fallthru
    _

</llo_original>
